<compile_context>
chip_gen: v5e
topology: v5e:2x2
jax: 0.10.0
libtpu: 0.0.40
codegen_flags: <defaults>
</compile_context>

<pallas_src>
import functools

import jax
import jax.numpy as jnp
from jax.experimental import pallas as pl
from jax.experimental.pallas import tpu as pltpu

NEG_SLOPE = 0.01  # nn.LeakyReLU default negative_slope


def _round_up(x, m):
    return (x + m - 1) // m * m


def _cdiv(a, b):
    return -(-a // b)


def _pick_tile(dim, max_tile, align):
    """Near-equal `align`-multiple split of `dim`.

    Returns (tile, padded_dim) with padded_dim % tile == 0 and tile <= max_tile
    (once aligned).  Avoids padding `dim` all the way up to a multiple of
    `max_tile`, which wasted up to ~2x MACs and HBM traffic for awkward sizes.
    """
    dim_a = _round_up(dim, align)
    if dim_a <= max_tile:
        return dim_a, dim_a
    n_tiles = _cdiv(dim_a, max_tile)
    tile = _round_up(_cdiv(dim_a, n_tiles), align)
    return tile, tile * n_tiles


def mono_convex_kernel_single_k(x_ref, wt_ref, b_ref, o_ref, *, inv_scale):
    """grid_k == 1 fast path: no accumulator scratch, no pl.when branches."""
    o = jnp.dot(x_ref[...], wt_ref[...], preferred_element_type=jnp.float32)
    o = (o + b_ref[...].astype(jnp.float32)) * inv_scale
    # LeakyReLU(o) == max(o, 0.01*o): single VALU op instead of compare+select.
    o_ref[...] = jnp.maximum(o, NEG_SLOPE * o).astype(o_ref.dtype)


def mono_convex_kernel(x_ref, wt_ref, b_ref, o_ref, acc_ref, *, inv_scale):
    """General path: K split across grid axis 2 with a VMEM f32 accumulator."""
    k = pl.program_id(2)
    partial = jnp.dot(x_ref[...], wt_ref[...],
                      preferred_element_type=jnp.float32)  # (tm, tn) f32

    @pl.when(k == 0)
    def _():
        # Direct assign on the first k-step: saves one full tm x tn f32
        # store+load vs zero-init followed by +=.
        acc_ref[...] = partial

    @pl.when(k != 0)
    def _():
        acc_ref[...] += partial

    @pl.when(k == pl.num_programs(2) - 1)
    def _():
        o = (acc_ref[...] + b_ref[...].astype(jnp.float32)) * inv_scale
        o_ref[...] = jnp.maximum(o, NEG_SLOPE * o).astype(o_ref.dtype)


def mono_convex(x, w, b, *, tm=512, tn=512, tk=1024, cast_to_bf16=False):
    """MonoConvex forward.

    x: (B, in_features), w: (out_features, in_features), b: (out_features,).
    """
    B, K = x.shape
    N, K2 = w.shape
    assert K == K2 and b.shape == (N,)
    out_dtype = x.dtype

    # Weight clamp + transpose hoisted out of the kernel (layout/elementwise
    # plumbing, fused by XLA with the pad below).
    # TODO(synk): w/b are static parameters in the PyTorch module — precompute
    # the clamped/transposed/padded weight once and cache it across calls.
    wt = jnp.maximum(w, 0).T  # (K, N), clamp(min=0) applied exactly once

    if cast_to_bf16:
        # Optional: halves HBM traffic for bandwidth-bound f32 inputs; the MXU
        # still accumulates in f32 via preferred_element_type.  Numerics change
        # slightly, so this is off by default.
        x = x.astype(jnp.bfloat16)
        wt = wt.astype(jnp.bfloat16)

    # Tile sizes: near-equal aligned splits (8 sublanes on M, 128 lanes on N/K).
    tm, Bp = _pick_tile(B, tm, 8)
    tn, Np = _pick_tile(N, tn, 128)
    tk, Kp = _pick_tile(K, tk, 128)

    # Pad only when needed.  Zero-padding is exact: clamp(0)=0 so padded K rows
    # and N cols contribute nothing real; padded B rows are sliced off at the end.
    xp = x if (Bp == B and Kp == K) else jnp.pad(x, ((0, Bp - B), (0, Kp - K)))
    wtp = wt if (Kp == K and Np == N) else jnp.pad(wt, ((0, Kp - K), (0, Np - N)))
    bp = (b if Np == N else jnp.pad(b, (0, Np - N))).reshape(1, Np)

    inv_scale = 1.0 / (2.0 * K)  # scale uses the *original* in_features

    grid_i, grid_j, grid_k = Bp // tm, Np // tn, Kp // tk
    single_k = grid_k == 1

    # Explicit VMEM budget: double-buffered inputs/outputs + f32 accumulator,
    # plus headroom.  Keeps larger tiles from tripping per-generation default
    # scoped limits while staying well under v7x's 64 MiB physical VMEM.
    in_bytes = 2 * (tm * tk * xp.dtype.itemsize
                    + tk * tn * wtp.dtype.itemsize
                    + tn * bp.dtype.itemsize)
    out_bytes = 2 * tm * tn * jnp.dtype(out_dtype).itemsize
    acc_bytes = 0 if single_k else tm * tn * 4
    vmem_limit = int(max(in_bytes + out_bytes + acc_bytes + (4 << 20), 16 << 20))

    compiler_params = pltpu.CompilerParams(
        dimension_semantics=(("parallel", "parallel") if single_k
                             else ("parallel", "parallel", "arbitrary")),
        vmem_limit_bytes=vmem_limit,
    )
    # TODO(synk): on v7x, if grid_i*grid_j == 1 for a large problem, shrink tm/tn
    # so both TensorCores get (i, j) tiles (or use CORE_PARALLEL on a leading axis).

    if single_k:
        out = pl.pallas_call(
            functools.partial(mono_convex_kernel_single_k, inv_scale=inv_scale),
            out_shape=jax.ShapeDtypeStruct((Bp, Np), out_dtype),
            grid_spec=pltpu.PrefetchScalarGridSpec(
                num_scalar_prefetch=0,
                grid=(grid_i, grid_j),
                in_specs=[
                    pl.BlockSpec((tm, tk), lambda i, j: (i, 0)),   # x tile
                    pl.BlockSpec((tk, tn), lambda i, j: (0, j)),   # w^T tile
                    pl.BlockSpec((1, tn), lambda i, j: (0, j)),    # bias tile
                ],
                out_specs=pl.BlockSpec((tm, tn), lambda i, j: (i, j)),
            ),
            compiler_params=compiler_params,
        )(xp, wtp, bp)
    else:
        out = pl.pallas_call(
            functools.partial(mono_convex_kernel, inv_scale=inv_scale),
            out_shape=jax.ShapeDtypeStruct((Bp, Np), out_dtype),
            grid_spec=pltpu.PrefetchScalarGridSpec(
                num_scalar_prefetch=0,
                grid=(grid_i, grid_j, grid_k),
                in_specs=[
                    pl.BlockSpec((tm, tk), lambda i, j, k: (i, k)),  # x tile
                    pl.BlockSpec((tk, tn), lambda i, j, k: (k, j)),  # w^T tile
                    pl.BlockSpec((1, tn), lambda i, j, k: (0, j)),   # bias tile
                ],
                out_specs=pl.BlockSpec((tm, tn), lambda i, j, k: (i, j)),
                scratch_shapes=[pltpu.VMEM((tm, tn), jnp.float32)],
            ),
            compiler_params=compiler_params,
        )(xp, wtp, bp)

    if Bp == B and Np == N:
        return out
    return out[:B, :N]


def mono_convex_ref(x, w, b):
    o = (x @ jnp.maximum(w, 0.0).T + b) / (2.0 * x.shape[-1])
    return jnp.maximum(o, NEG_SLOPE * o)  # LeakyReLU


if __name__ == "__main__":
    key = jax.random.PRNGKey(0)
    kx1, kw1, kx2, kw2 = jax.random.split(key, 4)

    # --- Test 1: small MLP-sized layer (single-k fast path) -----------------
    B, in_features, out_features = 8, 32, 16
    x1 = jax.random.normal(kx1, (B, in_features), dtype=jnp.float32)
    # Deterministic parameter init matching MonoLinear.__init__: w ~ N(0,1)+2, b=0.
    w1 = jax.random.normal(kw1, (out_features, in_features), dtype=jnp.float32) + 2.0
    b1 = jnp.zeros((out_features,), dtype=jnp.float32)

    y1 = mono_convex(x1, w1, b1)
    jax.block_until_ready(y1)
    y1_ref = mono_convex_ref(x1, w1, b1)
    assert y1.shape == (B, out_features)
    assert jnp.allclose(y1, y1_ref, atol=2e-5, rtol=1e-4), "mismatch (single-k path)"

    # --- Test 2: awkward sizes with small tiles (multi-k accumulator path) --
    B2, in2, out2 = 16, 300, 130
    x2 = jax.random.normal(kx2, (B2, in2), dtype=jnp.float32)
    w2 = jax.random.normal(kw2, (out2, in2), dtype=jnp.float32) + 2.0
    b2 = jnp.zeros((out2,), dtype=jnp.float32)

    y2 = mono_convex(x2, w2, b2, tm=8, tn=128, tk=128)  # grid (2, 2, 3)
    jax.block_until_ready(y2)
    y2_ref = mono_convex_ref(x2, w2, b2)
    assert y2.shape == (B2, out2)
    assert jnp.allclose(y2, y2_ref, atol=2e-5, rtol=1e-4), "mismatch (multi-k path)"

    print("KERNEL_OK")
</pallas_src>

<mosaic_0001>
module attributes {stable_mosaic.version = 11 : i64} {
  func.func @mono_convex_kernel_single_k(%arg0: i32, %arg1: i32, %arg2: memref<8x128xf32, #tpu.memory_space<vmem>>, %arg3: memref<128x128xf32, #tpu.memory_space<vmem>>, %arg4: memref<1x128xf32, #tpu.memory_space<vmem>>, %arg5: memref<8x128xf32, #tpu.memory_space<vmem>>) attributes {dimension_semantics = [#tpu.dimension_semantics<parallel>, #tpu.dimension_semantics<parallel>], iteration_bounds = array<i64: 1, 1>, scalar_prefetch = 0 : i64, scratch_operands = 0 : i64, tpu.core_type = #tpu.core_type<tc>, window_params = [{transform_indices = @transform_0, window_bounds = array<i64: 8, 128>}, {transform_indices = @transform_1, window_bounds = array<i64: 128, 128>}, {transform_indices = @transform_2, window_bounds = array<i64: 1, 128>}, {transform_indices = @transform_3, window_bounds = array<i64: 8, 128>}]} {
    %c0 = arith.constant 0 : index
    %c0_0 = arith.constant 0 : index
    %0 = vector.load %arg2[%c0, %c0_0] : memref<8x128xf32, #tpu.memory_space<vmem>>, vector<8x128xf32>
    %c0_1 = arith.constant 0 : index
    %c0_2 = arith.constant 0 : index
    %1 = vector.load %arg3[%c0_1, %c0_2] : memref<128x128xf32, #tpu.memory_space<vmem>>, vector<128x128xf32>
    %cst = arith.constant dense<0.000000e+00> : vector<8x128xf32>
    %2 = tpu.matmul %0, %1, %cst {dimension_numbers = #tpu.dot_dimension_numbers<[1], [0], [0], [1], [0, 0, 1, 1], [], []>} : vector<8x128xf32>, vector<128x128xf32>, vector<8x128xf32> -> vector<8x128xf32>
    %c0_3 = arith.constant 0 : index
    %c0_4 = arith.constant 0 : index
    %3 = vector.load %arg4[%c0_3, %c0_4] : memref<1x128xf32, #tpu.memory_space<vmem>>, vector<1x128xf32>
    %4 = vector.broadcast %3 : vector<1x128xf32> to vector<8x128xf32>
    %5 = arith.addf %2, %4 : vector<8x128xf32>
    %cst_5 = arith.constant 1.562500e-02 : f32
    %6 = vector.broadcast %cst_5 : f32 to vector<8x128xf32>
    %7 = arith.mulf %5, %6 : vector<8x128xf32>
    %cst_6 = arith.constant 0.00999999977 : f32
    %8 = vector.broadcast %cst_6 : f32 to vector<8x128xf32>
    %9 = arith.mulf %8, %7 : vector<8x128xf32>
    %10 = arith.maximumf %7, %9 : vector<8x128xf32>
    %c0_7 = arith.constant 0 : index
    %c0_8 = arith.constant 0 : index
    %11 = vector.load %arg5[%c0_7, %c0_8] : memref<8x128xf32, #tpu.memory_space<vmem>>, vector<8x128xf32>
    tpu.vector_store %arg5[%c0_7, %c0_8], %10 {strides = array<i32>} : memref<8x128xf32, #tpu.memory_space<vmem>>, vector<8x128xf32>,
    return
  }
  func.func @transform_0(%arg0: i32, %arg1: i32) -> (i32, i32) {
    %c0_i32 = arith.constant 0 : i32
    %c0_i32_0 = arith.constant 0 : i32
    return %arg0, %c0_i32 : i32, i32
  }
  func.func @transform_1(%arg0: i32, %arg1: i32) -> (i32, i32) {
    %c0_i32 = arith.constant 0 : i32
    %c0_i32_0 = arith.constant 0 : i32
    return %c0_i32, %arg1 : i32, i32
  }
  func.func @transform_2(%arg0: i32, %arg1: i32) -> (i32, i32) {
    %c0_i32 = arith.constant 0 : i32
    %c0_i32_0 = arith.constant 0 : i32
    return %c0_i32, %arg1 : i32, i32
  }
  func.func @transform_3(%arg0: i32, %arg1: i32) -> (i32, i32) {
    %c0_i32 = arith.constant 0 : i32
    return %arg0, %arg1 : i32, i32
  }
}

</mosaic_0001>

<llo_original>
// kernel: tpu_custom_call.1
$region0: #{tpu_custom_call.1}
  #allocation0 [shape = 'u32[]', space=smem, size = 0x4, offset = 0x4, fixed_abs, tag = 'smem constant byte address 0x4 - core index']
  #allocation1 [shape = 'u32[72,128]{1,0:T(1,128)}', space=vmem, size = 0x9000, scoped, tag = 'internal scratch']
  %s0 = inlined_call_operand.hbm [shape: f32[8,128], index: 0, kind: input, shape index: {}]
  %s1 = inlined_call_operand.hbm [shape: f32[128,128], index: 1, kind: input, shape index: {}]
  %s2 = inlined_call_operand.vmem [shape: f32[1,128], index: 2, kind: input, shape index: {}]
  %s3 = inlined_call_operand.hbm [shape: f32[8,128], index: 3, kind: output, shape index: {}]
  %s4 = sld [smem:[#allocation0]]
  $region30: #{tpu_custom_call.1} parent=0
    _
  %s6 = ssub.s32 1, %s4
  %s7 = scalar_select 0, %s6, %s4
  $region1: #{tpu_custom_call.1} parent=0
    #allocation2 [shape = 'u8[4096]{0}', space=vmem, size = 0x1000, scoped, tag = 'input window, operand 0, single buffered']
    #allocation3 [shape = 's32[1]{0}', space=sflag, size = 0x4, scoped, tag = 'scoped memory for tpu_custom_call.1']
    #allocation4 [shape = 's32[1]{0}', space=sflag, size = 0x4, scoped, tag = 'scoped memory for tpu_custom_call.1']
    #allocation5 [shape = 'u8[65536]{0}', space=vmem, size = 0x10000, scoped, tag = 'input window, operand 1, single buffered']
    #allocation6 [shape = 's32[1]{0}', space=sflag, size = 0x4, scoped, tag = 'scoped memory for tpu_custom_call.1']
    #allocation7 [shape = 'u8[4096]{0}', space=vmem, size = 0x1000, scoped, tag = 'output window, operand 0, single buffered']
    %8 = vsyncpa [#allocation3], 0
    %9 = vsyncpa [#allocation6], 0
    %10 = vsyncpa [#allocation4], 0
    // Predicated region
    $region2: #{tpu_custom_call.1} parent=1 // pred_check
      _
    $region3: #{tpu_custom_call.1} parent=1 // pred_check_branch
      %12 = sbr.rel (0) target = $region5
    $region4: #{tpu_custom_call.1} parent=1 // pred_region
      %14 = vsyncadd [#allocation3], 0
      %s16 = sshll.u32 %s0, 4
      %s17 = int_to_ptr.hbm [resolvable:$true] %s16
      %s18 = sshll.u32 [#allocation2], 4
      %s19 = int_to_ptr.vmem [resolvable:$true] %s18
      %21 = dma.hbm_to_vmem [thread:$0]  %s17, 128, %s19, [#allocation3]
    $region5: #{tpu_custom_call.1} parent=1 // pred_fallthru
      _
    // Predicated region
    $region6: #{tpu_custom_call.1} parent=1 // pred_check
      _
    $region7: #{tpu_custom_call.1} parent=1 // pred_check_branch
      %23 = sbr.rel (0) target = $region9
    $region8: #{tpu_custom_call.1} parent=1 // pred_region
      %25 = vsyncadd [#allocation6], 0
      %s26 = sshll.u32 %s1, 4
      %s27 = int_to_ptr.hbm [resolvable:$true] %s26
      %s28 = sshll.u32 [#allocation5], 4
      %s29 = int_to_ptr.vmem [resolvable:$true] %s28
      %34 = dma.hbm_to_vmem [thread:$0]  %s27, 2048, %s29, [#allocation6], 128, 128, 8
    $region9: #{tpu_custom_call.1} parent=1 // pred_fallthru
      _
    // Predicated region
    $region10: #{tpu_custom_call.1} parent=1 // pred_check
      _
    $region11: #{tpu_custom_call.1} parent=1 // pred_check_branch
      %36 = sbr.rel (0) target = $region13
    $region12: #{tpu_custom_call.1} parent=1 // pred_region
      _
    $region13: #{tpu_custom_call.1} parent=1 // pred_fallthru
      _
    // Predicated region
    $region14: #{tpu_custom_call.1} parent=1 // pred_check
      _
    $region15: #{tpu_custom_call.1} parent=1 // pred_check_branch
      %38 = sbr.rel (0) target = $region17
    $region16: #{tpu_custom_call.1} parent=1 // pred_region
      %40 = dma.done [#allocation3], 128
    $region17: #{tpu_custom_call.1} parent=1 // pred_fallthru
      _
    // Predicated region
    $region18: #{tpu_custom_call.1} parent=1 // pred_check
      _
    $region19: #{tpu_custom_call.1} parent=1 // pred_check_branch
      %42 = sbr.rel (0) target = $region21
    $region20: #{tpu_custom_call.1} parent=1 // pred_region
      %44 = dma.done [#allocation6], 2048
    $region21: #{tpu_custom_call.1} parent=1 // pred_fallthru
      _
    %v45 = vld [vmem:[#allocation2] sm:$0xff]
    %v46 = vld [vmem:[#allocation5] sm:$0xff]
    %v47 = vld [vmem:[#allocation5 + $0x8] sm:$0xff]
    %v48 = vld [vmem:[#allocation5 + $0x10] sm:$0xff]
    %v49 = vld [vmem:[#allocation5 + $0x18] sm:$0xff]
    %v50 = vld [vmem:[#allocation5 + $0x20] sm:$0xff]
    %v51 = vld [vmem:[#allocation5 + $0x28] sm:$0xff]
    %v52 = vld [vmem:[#allocation5 + $0x30] sm:$0xff]
    %v53 = vld [vmem:[#allocation5 + $0x38] sm:$0xff]
    %v54 = vld [vmem:[#allocation5 + $0x40] sm:$0xff]
    %v55 = vld [vmem:[#allocation5 + $0x48] sm:$0xff]
    %v56 = vld [vmem:[#allocation5 + $0x50] sm:$0xff]
    %v57 = vld [vmem:[#allocation5 + $0x58] sm:$0xff]
    %v58 = vld [vmem:[#allocation5 + $0x60] sm:$0xff]
    %v59 = vld [vmem:[#allocation5 + $0x68] sm:$0xff]
    %v60 = vld [vmem:[#allocation5 + $0x70] sm:$0xff]
    %v61 = vld [vmem:[#allocation5 + $0x78] sm:$0xff]
    %v62 = vld [vmem:[%s2] sm:$0x1]
    %v64 = vperm.slane %v62, 0
    %66 = vmatpush.msra.mxu0 %v61
    %67 = vmatpush.msra.mxu0 %v60
    %68 = vmatpush.msra.mxu0 %v59
    %69 = vmatpush.msra.mxu0 %v58
    %70 = vmatpush.msra.mxu0 %v57
    %71 = vmatpush.msra.mxu0 %v56
    %72 = vmatpush.msra.mxu0 %v55
    %73 = vmatpush.msra.mxu0 %v54
    %74 = vmatpush.msra.mxu0 %v53
    %75 = vmatpush.msra.mxu0 %v52
    %76 = vmatpush.msra.mxu0 %v51
    %77 = vmatpush.msra.mxu0 %v50
    %78 = vmatpush.msra.mxu0 %v49
    %79 = vmatpush.msra.mxu0 %v48
    %80 = vmatpush.msra.mxu0 %v47
    %81 = vmatpush.msra.mxu0 %v46
    %82 = vmatmul.f32.gmra.mxu0 %v45
    %v83 = vpop.f32.mrf.mxu0
    %v84 = vadd.f32 %v64, %v83
    %85 = vdwg.mxu0
    %v86 = vmul.f32 %v84, 0.015625
    %v87 = vmul.f32 %v86, 0.01
    %v88 = vmax.f32 %v86, %v87
    %89 = vst [vmem:[#allocation7] sm:$0xff] %v88
    // Predicated region
    $region22: #{tpu_custom_call.1} parent=1 // pred_check
      _
    $region23: #{tpu_custom_call.1} parent=1 // pred_check_branch
      %91 = sbr.rel (0) target = $region25
    $region24: #{tpu_custom_call.1} parent=1 // pred_region
      %93 = vsyncadd [#allocation4], 0
      %s95 = sshll.u32 [#allocation7], 4
      %s96 = int_to_ptr.vmem [resolvable:$true] %s95
      %s97 = sshll.u32 %s3, 4
      %s98 = int_to_ptr.hbm [resolvable:$true] %s97
      %100 = dma.vmem_to_hbm [thread:$0]  %s96, 128, %s98, [#allocation4]
    $region25: #{tpu_custom_call.1} parent=1 // pred_fallthru
      _
    // Predicated region
    $region26: #{tpu_custom_call.1} parent=1 // pred_check
      _
    $region27: #{tpu_custom_call.1} parent=1 // pred_check_branch
      %102 = sbr.rel (0) target = $region29
    $region28: #{tpu_custom_call.1} parent=1 // pred_region
      %104 = dma.done [#allocation4], 128
    $region29: #{tpu_custom_call.1} parent=1 // pred_fallthru
      _
    %105 = vsyncpa [#allocation3], 1
    %106 = vsyncpa [#allocation6], 1
    %107 = vsyncpa [#allocation4], 1

</llo_original>
